<compile_context>
chip_gen: v5e
topology: v5e:2x2
jax: 0.10.0
libtpu: 0.0.40
codegen_flags: <defaults>
</compile_context>

<pallas_src>
import functools

import jax
import jax.numpy as jnp
from jax.experimental import pallas as pl
from jax.experimental.pallas import tpu as pltpu


def _round_up(x, m):
    return (x + m - 1) // m * m


def _distill_kl_kernel(ys_ref, yt_ref, out_ref, *, inv_T, n_rows):
    TB = ys_ref.shape[0]

    # Load this batch tile, promote to f32, scale by 1/T via multiply.
    ys = ys_ref[...].astype(jnp.float32) * inv_T
    yt = yt_ref[...].astype(jnp.float32) * inv_T

    # Student: only log z_s is needed (log_softmax never materialized).
    ys_max = jnp.max(ys, axis=-1, keepdims=True)
    ys_shift = ys - ys_max
    z_s = jnp.sum(jnp.exp(ys_shift), axis=-1, keepdims=True)

    # Teacher: shifted logits, exp, partition function.
    yt_max = jnp.max(yt, axis=-1, keepdims=True)
    yt_shift = yt - yt_max
    exp_t = jnp.exp(yt_shift)
    z_t = jnp.sum(exp_t, axis=-1, keepdims=True)

    # Fused KL per row (uses sum_c p_t == 1):
    #   KL_row = (1/z_t) * sum_c exp_t*(yt_shift - ys_shift) - (log z_t - log z_s)
    s_row = jnp.sum(exp_t * (yt_shift - ys_shift), axis=-1, keepdims=True)
    kl_rows = s_row * pl.reciprocal(z_t, approx=True) - (jnp.log(z_t) - jnp.log(z_s))

    # Mask out-of-bounds rows of the (possibly partial) last tile BEFORE the
    # reduction.  jnp.where is a select, so garbage/NaN in masked rows never
    # reaches the sum.
    row = pl.program_id(0) * TB + jax.lax.broadcasted_iota(jnp.int32, kl_rows.shape, 0)
    kl_rows = jnp.where(row < n_rows, kl_rows, 0.0)

    # Per-tile partial sum, written as a lane-dense (1,8,128) block (all slots
    # hold the same scalar; the wrapper reads [:, 0, 0]).
    partial = jnp.sum(kl_rows)
    out_ref[...] = jnp.full(out_ref.shape, partial, dtype=jnp.float32)


def distill_kl(y_s, y_t, T, *, block_rows=None):
    """JAX/Pallas equivalent of DistillKL(T)(y_s, y_t). Inputs: (B, C) logits."""
    assert y_s.shape == y_t.shape and y_s.ndim == 2
    B, C = y_s.shape
    itemsize = jnp.dtype(y_s.dtype).itemsize

    # VMEM accounting valid across generations (v7x has only 64 MiB physical):
    # keep the estimated working set <= ~40 MiB and the scoped limit at 48 MiB
    # (still a big raise over the v5e 16 MiB / v6e 32 MiB defaults).
    VMEM_LIMIT = 48 * 1024 * 1024
    WORKSET_BUDGET = 40 * 1024 * 1024

    # --- pick the batch-tile size -------------------------------------------
    if block_rows is None:
        # Working set per grid step:
        #   2 inputs x 2 pipeline buffers x (TB*C*itemsize)   (auto-pipelining)
        # + ~5 live f32 (TB, C) temporaries after the upcast  (shift/exp/product)
        bytes_per_row = C * (4 * itemsize + 5 * 4)
        rows_budget = WORKSET_BUDGET // max(1, bytes_per_row)
        # Past ~8 MiB per input buffer there is no further roofline gain.
        rows_buf_cap = (8 << 20) // max(1, C * itemsize)
        block_rows = min(rows_budget, rows_buf_cap)
        # v7x megacore occupancy: keep >= 4 grid steps alive as long as each
        # per-input buffer stays >= ~1 MiB (amortizes the ~0.35 us/step cost).
        rows_1mib = (1 << 20) // max(1, C * itemsize)
        rows_4_tiles = -(-B // 4)
        if rows_4_tiles >= rows_1mib:
            block_rows = min(block_rows, rows_4_tiles)

    TB = max(8, (int(block_rows) // 8) * 8)     # sublane-aligned
    TB = min(TB, _round_up(B, 8))               # never bigger than one padded tile
    G = pl.cdiv(B, TB)                          # NO jnp.pad: last tile masked in-kernel

    kernel = functools.partial(_distill_kl_kernel, inv_T=1.0 / float(T), n_rows=B)

    partials = pl.pallas_call(
        kernel,
        out_shape=jax.ShapeDtypeStruct((G, 8, 128), jnp.float32),
        grid_spec=pltpu.PrefetchScalarGridSpec(
            num_scalar_prefetch=0,
            grid=(G,),
            in_specs=[
                pl.BlockSpec((TB, C), lambda i: (i, 0)),
                pl.BlockSpec((TB, C), lambda i: (i, 0)),
            ],
            out_specs=pl.BlockSpec((1, 8, 128), lambda i: (i, 0, 0)),
        ),
        compiler_params=pltpu.CompilerParams(
            dimension_semantics=("parallel",),   # independent tiles -> megacore on v7x
            vmem_limit_bytes=VMEM_LIMIT,
        ),
        cost_estimate=pl.CostEstimate(
            flops=10 * B * C,
            transcendentals=2 * B * C,
            bytes_accessed=2 * B * C * itemsize + G * 8 * 128 * 4,
        ),
    )(y_s, y_t)

    total = jnp.sum(partials[:, 0, 0])
    # T^2 / B scaling done once on the scalar.
    return total * (float(T) ** 2 / B)


def _distill_kl_ref(y_s, y_t, T):
    """Pure-JAX reference for correctness check."""
    log_p_s = jax.nn.log_softmax(y_s.astype(jnp.float32) / T, axis=1)
    p_t = jax.nn.softmax(y_t.astype(jnp.float32) / T, axis=1)
    log_p_t = jax.nn.log_softmax(y_t.astype(jnp.float32) / T, axis=1)
    kl = jnp.sum(p_t * (log_p_t - log_p_s))
    return kl * (T ** 2) / y_s.shape[0]


if __name__ == "__main__":
    T = 4.0  # distillation temperature (module __init__ arg)
    # Tolerances loosened slightly for the approx (EUP) reciprocal.
    RTOL, ATOL = 5e-3, 1e-4

    key = jax.random.PRNGKey(0)
    k_s, k_t, k_s2, k_t2, k_s3, k_t3 = jax.random.split(key, 6)

    # Case 1: small f32 logits, single full tile.
    B, C = 8, 32
    y_s = jax.random.normal(k_s, (B, C), dtype=jnp.float32)
    y_t = jax.random.normal(k_t, (B, C), dtype=jnp.float32)
    loss = jax.block_until_ready(distill_kl(y_s, y_t, T))
    ref = jax.block_until_ready(_distill_kl_ref(y_s, y_t, T))
    assert jnp.allclose(loss, ref, rtol=RTOL, atol=ATOL), (loss, ref)

    # Case 2: bf16 logits, ragged batch, multiple grid tiles (exercises the
    # parallel grid, in-kernel last-tile masking, and the upcast path).
    B2, C2 = 20, 32
    y_s2 = jax.random.normal(k_s2, (B2, C2), dtype=jnp.bfloat16)
    y_t2 = jax.random.normal(k_t2, (B2, C2), dtype=jnp.bfloat16)
    loss2 = jax.block_until_ready(distill_kl(y_s2, y_t2, T, block_rows=8))
    ref2 = jax.block_until_ready(_distill_kl_ref(y_s2, y_t2, T))
    assert jnp.allclose(loss2, ref2, rtol=RTOL, atol=ATOL), (loss2, ref2)

    # Case 3: batch smaller than one sublane group (B < 8) — single partial tile.
    B3, C3 = 6, 32
    y_s3 = jax.random.normal(k_s3, (B3, C3), dtype=jnp.float32)
    y_t3 = jax.random.normal(k_t3, (B3, C3), dtype=jnp.float32)
    loss3 = jax.block_until_ready(distill_kl(y_s3, y_t3, T))
    ref3 = jax.block_until_ready(_distill_kl_ref(y_s3, y_t3, T))
    assert jnp.allclose(loss3, ref3, rtol=RTOL, atol=ATOL), (loss3, ref3)

    print("KERNEL_OK")
</pallas_src>

<mosaic_0001>
module attributes {stable_mosaic.version = 11 : i64} {
  func.func @_distill_kl_kernel(%arg0: i32, %arg1: memref<8x32xf32, #tpu.memory_space<vmem>>, %arg2: memref<8x32xf32, #tpu.memory_space<vmem>>, %arg3: memref<1x8x128xf32, #tpu.memory_space<vmem>>) attributes {dimension_semantics = [#tpu.dimension_semantics<parallel>], iteration_bounds = array<i64: 1>, scalar_prefetch = 0 : i64, scratch_operands = 0 : i64, tpu.core_type = #tpu.core_type<tc>, window_params = [{transform_indices = @transform_0, window_bounds = array<i64: 8, 32>}, {transform_indices = @transform_1, window_bounds = array<i64: 8, 32>}, {transform_indices = @transform_2, window_bounds = array<i64: 1, 8, 128>}]} {
    %c0 = arith.constant 0 : index
    %c0_0 = arith.constant 0 : index
    %0 = vector.load %arg1[%c0, %c0_0] : memref<8x32xf32, #tpu.memory_space<vmem>>, vector<8x32xf32>
    %cst = arith.constant 2.500000e-01 : f32
    %1 = vector.broadcast %cst : f32 to vector<8x32xf32>
    %2 = arith.mulf %0, %1 : vector<8x32xf32>
    %c0_1 = arith.constant 0 : index
    %c0_2 = arith.constant 0 : index
    %3 = vector.load %arg2[%c0_1, %c0_2] : memref<8x32xf32, #tpu.memory_space<vmem>>, vector<8x32xf32>
    %cst_3 = arith.constant 2.500000e-01 : f32
    %4 = vector.broadcast %cst_3 : f32 to vector<8x32xf32>
    %5 = arith.mulf %3, %4 : vector<8x32xf32>
    %cst_4 = arith.constant dense<0xFF800000> : vector<8xf32>
    %6 = vector.multi_reduction <maximumf>, %2, %cst_4 [1] : vector<8x32xf32> to vector<8xf32>
    %7 = vector.shape_cast %6 : vector<8xf32> to vector<8x1xf32>
    %8 = vector.broadcast %7 : vector<8x1xf32> to vector<8x32xf32>
    %9 = arith.subf %2, %8 : vector<8x32xf32>
    %10 = math.exp %9 : vector<8x32xf32>
    %cst_5 = arith.constant dense<0.000000e+00> : vector<8xf32>
    %11 = vector.multi_reduction <add>, %10, %cst_5 [1] : vector<8x32xf32> to vector<8xf32>
    %12 = vector.shape_cast %11 : vector<8xf32> to vector<8x1xf32>
    %cst_6 = arith.constant dense<0xFF800000> : vector<8xf32>
    %13 = vector.multi_reduction <maximumf>, %5, %cst_6 [1] : vector<8x32xf32> to vector<8xf32>
    %14 = vector.shape_cast %13 : vector<8xf32> to vector<8x1xf32>
    %15 = vector.broadcast %14 : vector<8x1xf32> to vector<8x32xf32>
    %16 = arith.subf %5, %15 : vector<8x32xf32>
    %17 = math.exp %16 : vector<8x32xf32>
    %cst_7 = arith.constant dense<0.000000e+00> : vector<8xf32>
    %18 = vector.multi_reduction <add>, %17, %cst_7 [1] : vector<8x32xf32> to vector<8xf32>
    %19 = vector.shape_cast %18 : vector<8xf32> to vector<8x1xf32>
    %20 = arith.subf %16, %9 : vector<8x32xf32>
    %21 = arith.mulf %17, %20 : vector<8x32xf32>
    %cst_8 = arith.constant dense<0.000000e+00> : vector<8xf32>
    %22 = vector.multi_reduction <add>, %21, %cst_8 [1] : vector<8x32xf32> to vector<8xf32>
    %23 = vector.shape_cast %22 : vector<8xf32> to vector<8x1xf32>
    %24 = tpu.reciprocal %19 {approx = true} : vector<8x1xf32> -> vector<8x1xf32>
    %25 = arith.mulf %23, %24 : vector<8x1xf32>
    %26 = math.log %19 : vector<8x1xf32>
    %27 = math.log %12 : vector<8x1xf32>
    %28 = arith.subf %26, %27 : vector<8x1xf32>
    %29 = arith.subf %25, %28 : vector<8x1xf32>
    %c8_i32 = arith.constant 8 : i32
    %30 = arith.muli %arg0, %c8_i32 : i32
    %31 = tpu.iota {dimensions = array<i32: 0>} : vector<8x1xi32>
    %32 = vector.broadcast %30 : i32 to vector<8x1xi32>
    %33 = arith.addi %32, %31 : vector<8x1xi32>
    %c8_i32_9 = arith.constant 8 : i32
    %34 = vector.broadcast %c8_i32_9 : i32 to vector<8x1xi32>
    %35 = arith.cmpi slt, %33, %34 : vector<8x1xi32>
    %cst_10 = arith.constant 0.000000e+00 : f32
    %36 = vector.broadcast %cst_10 : f32 to vector<8x1xf32>
    %37 = arith.select %35, %29, %36 : vector<8x1xi1>, vector<8x1xf32>
    %38 = vector.shape_cast %37 : vector<8x1xf32> to vector<1x8x1xf32>
    %cst_11 = arith.constant dense<0.000000e+00> : vector<1xf32>
    %39 = vector.multi_reduction <add>, %38, %cst_11 [1, 2] : vector<1x8x1xf32> to vector<1xf32>
    %40 = vector.shape_cast %39 : vector<1xf32> to vector<1x1x1xf32>
    %41 = vector.extract %40[0, 0, 0] : f32 from vector<1x1x1xf32>
    %42 = vector.broadcast %41 : f32 to vector<1x8x128xf32>
    %c0_12 = arith.constant 0 : index
    %c0_13 = arith.constant 0 : index
    %c0_14 = arith.constant 0 : index
    %43 = vector.load %arg3[%c0_12, %c0_13, %c0_14] : memref<1x8x128xf32, #tpu.memory_space<vmem>>, vector<1x8x128xf32>
    tpu.vector_store %arg3[%c0_12, %c0_13, %c0_14], %42 {strides = array<i32>} : memref<1x8x128xf32, #tpu.memory_space<vmem>>, vector<1x8x128xf32>,
    return
  }
  func.func @transform_0(%arg0: i32) -> (i32, i32) {
    %c0_i32 = arith.constant 0 : i32
    %c0_i32_0 = arith.constant 0 : i32
    return %arg0, %c0_i32 : i32, i32
  }
  func.func @transform_1(%arg0: i32) -> (i32, i32) {
    %c0_i32 = arith.constant 0 : i32
    %c0_i32_0 = arith.constant 0 : i32
    return %arg0, %c0_i32 : i32, i32
  }
  func.func @transform_2(%arg0: i32) -> (i32, i32, i32) {
    %c0_i32 = arith.constant 0 : i32
    %c0_i32_0 = arith.constant 0 : i32
    %c0_i32_1 = arith.constant 0 : i32
    return %arg0, %c0_i32, %c0_i32_0 : i32, i32, i32
  }
}

</mosaic_0001>

<llo_original>
// kernel: tpu_custom_call.1
$region0: #{tpu_custom_call.1}
  #allocation0 [shape = 'u32[]', space=smem, size = 0x4, offset = 0x4, fixed_abs, tag = 'smem constant byte address 0x4 - core index']
  #allocation1 [shape = 'u32[72,128]{1,0:T(1,128)}', space=vmem, size = 0x9000, scoped, tag = 'internal scratch']
  %s0 = inlined_call_operand.hbm [shape: f32[8,32], index: 0, kind: input, shape index: {}]
  %s1 = inlined_call_operand.hbm [shape: f32[8,32], index: 1, kind: input, shape index: {}]
  %s2 = inlined_call_operand.hbm [shape: f32[1,8,128], index: 2, kind: output, shape index: {}]
  %s3 = sld [smem:[#allocation0]]
  $region26: #{tpu_custom_call.1} parent=0
    _
  %s5 = ssub.s32 1, %s3
  %s6 = scalar_select 0, %s5, %s3
  $region1: #{tpu_custom_call.1} parent=0
    #allocation2 [shape = 'u8[4096]{0}', space=vmem, size = 0x1000, scoped, tag = 'input window, operand 0, single buffered']
    #allocation3 [shape = 's32[1]{0}', space=sflag, size = 0x4, scoped, tag = 'scoped memory for tpu_custom_call.1']
    #allocation4 [shape = 's32[1]{0}', space=sflag, size = 0x4, scoped, tag = 'scoped memory for tpu_custom_call.1']
    #allocation5 [shape = 'u8[4096]{0}', space=vmem, size = 0x1000, scoped, tag = 'input window, operand 1, single buffered']
    #allocation6 [shape = 's32[1]{0}', space=sflag, size = 0x4, scoped, tag = 'scoped memory for tpu_custom_call.1']
    #allocation7 [shape = 'u8[4096]{0}', space=vmem, size = 0x1000, scoped, tag = 'output window, operand 0, single buffered']
    %7 = vsyncpa [#allocation3], 0
    %8 = vsyncpa [#allocation6], 0
    %9 = vsyncpa [#allocation4], 0
    // Predicated region
    $region2: #{tpu_custom_call.1} parent=1 // pred_check
      _
    $region3: #{tpu_custom_call.1} parent=1 // pred_check_branch
      %11 = sbr.rel (0) target = $region5
    $region4: #{tpu_custom_call.1} parent=1 // pred_region
      %13 = vsyncadd [#allocation3], 0
      %s15 = sshll.u32 %s0, 4
      %s16 = int_to_ptr.hbm [resolvable:$true] %s15
      %s17 = sshll.u32 [#allocation2], 4
      %s18 = int_to_ptr.vmem [resolvable:$true] %s17
      %20 = dma.hbm_to_vmem [thread:$0]  %s16, 128, %s18, [#allocation3]
    $region5: #{tpu_custom_call.1} parent=1 // pred_fallthru
      _
    // Predicated region
    $region6: #{tpu_custom_call.1} parent=1 // pred_check
      _
    $region7: #{tpu_custom_call.1} parent=1 // pred_check_branch
      %22 = sbr.rel (0) target = $region9
    $region8: #{tpu_custom_call.1} parent=1 // pred_region
      %24 = vsyncadd [#allocation6], 0
      %s26 = sshll.u32 %s1, 4
      %s27 = int_to_ptr.hbm [resolvable:$true] %s26
      %s28 = sshll.u32 [#allocation5], 4
      %s29 = int_to_ptr.vmem [resolvable:$true] %s28
      %31 = dma.hbm_to_vmem [thread:$0]  %s27, 128, %s29, [#allocation6]
    $region9: #{tpu_custom_call.1} parent=1 // pred_fallthru
      _
    // Predicated region
    $region10: #{tpu_custom_call.1} parent=1 // pred_check
      _
    $region11: #{tpu_custom_call.1} parent=1 // pred_check_branch
      %33 = sbr.rel (0) target = $region13
    $region12: #{tpu_custom_call.1} parent=1 // pred_region
      %35 = dma.done [#allocation3], 128
    $region13: #{tpu_custom_call.1} parent=1 // pred_fallthru
      _
    // Predicated region
    $region14: #{tpu_custom_call.1} parent=1 // pred_check
      _
    $region15: #{tpu_custom_call.1} parent=1 // pred_check_branch
      %37 = sbr.rel (0) target = $region17
    $region16: #{tpu_custom_call.1} parent=1 // pred_region
      %39 = dma.done [#allocation6], 128
    $region17: #{tpu_custom_call.1} parent=1 // pred_fallthru
      _
    %v40 = vld [vmem:[#allocation2] sm:$0xff]
    %v41 = vmul.f32 %v40, 0.25
    %v42 = vld [vmem:[#allocation5] sm:$0xff]
    %v43 = vmul.f32 %v42, 0.25
    %vm44 = vcmask 261120
    %v45 = vsel %vm44, %v41, -inf
    %46 = vmax.xlane.f32.xlu0 %v45
    %v47 = vpop.xlane.xlu0 %46
    %v48 = vsub.f32 %v41, %v47
    %v49 = vmul.f32 %v48, 1.442695
    %v50 = vpow.pop %v49
    %v51 = vsel %vm44, %v50, 0.0
    %52 = vadd.xlane.f32.xlu0 %v51
    %v53 = vpop.xlane.xlu0 %52
    %v54 = vsel %vm44, %v43, -inf
    %55 = vmax.xlane.f32.xlu0 %v54
    %v56 = vpop.xlane.xlu0 %55
    %v57 = vsub.f32 %v43, %v56
    %v58 = vmul.f32 %v57, 1.442695
    %v59 = vpow.pop %v58
    %v60 = vsel %vm44, %v59, 0.0
    %61 = vadd.xlane.f32.xlu0 %v60
    %v62 = vpop.xlane.xlu0 %61
    %v63 = vsub.f32 %v57, %v48
    %v64 = vmul.f32 %v59, %v63
    %v65 = vsel %vm44, %v64, 0.0
    %66 = vadd.xlane.f32.xlu0 %v65
    %v67 = vpop.xlane.xlu0 %66
    %v68 = vrcp.pop %v62
    %v69 = vmul.f32 %v67, %v68
    %v70 = vlog2.pop %v62
    %v71 = vmul.f32 %v70, 0.6931472
    %v72 = vlog2.pop %v53
    %v73 = vmul.f32 %v72, 0.6931472
    %v74 = vsub.f32 %v71, %v73
    %v75 = vsub.f32 %v69, %v74
    %s76 = smul.u32 0, 8
    %v77 = vlaneseq
    %v78 = vshrl.u32 %v77, 7
    %v79 = vstv %s76
    %v80 = vadd.s32 %v79, %v78
    %vm81 = vcmp.lt.s32.totalorder %v80, 8
    %v82 = vsel %vm81, %v75, 0.0
    %vm83 = vcmask 7168
    %v84 = vsel %vm83, %v82, 0.0
    %85 = vadd.xlane.f32.xlu0 %v84
    %v86 = vpop.xlane.xlu0 %85
    %v87 = vrot.slane %v86, 4
    %v88 = vadd.f32 %v86, %v87
    %v89 = vrot.slane %v88, 2
    %v90 = vadd.f32 %v88, %v89
    %v91 = vrot.slane %v90, 1
    %v92 = vadd.f32 %v90, %v91
    %s93 = vtos %v92
    %v94 = vstv %s93
    %95 = vst [vmem:[#allocation7] sm:$0xff] %v94
    // Predicated region
    $region18: #{tpu_custom_call.1} parent=1 // pred_check
      _
    $region19: #{tpu_custom_call.1} parent=1 // pred_check_branch
      %97 = sbr.rel (0) target = $region21
    $region20: #{tpu_custom_call.1} parent=1 // pred_region
      %99 = vsyncadd [#allocation4], 0
      %s101 = sshll.u32 [#allocation7], 4
      %s102 = int_to_ptr.vmem [resolvable:$true] %s101
      %s103 = sshll.u32 %s2, 4
      %s104 = int_to_ptr.hbm [resolvable:$true] %s103
      %106 = dma.vmem_to_hbm [thread:$0]  %s102, 128, %s104, [#allocation4]
    $region21: #{tpu_custom_call.1} parent=1 // pred_fallthru
      _
    // Predicated region
    $region22: #{tpu_custom_call.1} parent=1 // pred_check
      _
    $region23: #{tpu_custom_call.1} parent=1 // pred_check_branch
      %108 = sbr.rel (0) target = $region25
    $region24: #{tpu_custom_call.1} parent=1 // pred_region
      %110 = dma.done [#allocation4], 128
    $region25: #{tpu_custom_call.1} parent=1 // pred_fallthru
      _
    %111 = vsyncpa [#allocation3], 1
    %112 = vsyncpa [#allocation6], 1
    %113 = vsyncpa [#allocation4], 1

</llo_original>
